<compile_context>
chip_gen: v7x
topology: tpu7x:2x2x1
jax: 0.10.0
libtpu: 0.0.40
codegen_flags: <defaults>
</compile_context>

<pallas_src>
import jax
import jax.numpy as jnp
from jax import lax
from jax.experimental import pallas as pl
from jax.experimental.pallas import tpu as pltpu


def _make_kernel(Hout):
    """Builds the per-tile kernel. Hout = output rows per image (H even, Hout = H // 2)."""

    def kernel(x_ref, mw_ref, o_ref, xbuf_ref):
        # x_ref:    (TH, W)       flat input tile: tb images of H rows each, W on lanes
        # mw_ref:   (W, Wout)     constant banded 0/1 pooling matrix (W-direction taps)
        # o_ref:    (Bo, Wout)    flat output tile: tb images of Hout rows each
        # xbuf_ref: (8 + TH, W)   scratch: input copy at a sublane-aligned 8-row offset
        TH, _ = x_ref.shape
        Bo, _ = o_ref.shape

        # 1) Copy the input tile into the haloed scratch (aligned full-width store).
        xbuf_ref[pl.ds(8, TH), :] = x_ref[...]

        # 2) H-direction 3-tap / stride-2 pool: 3 sublane-strided loads + 2 VPU adds.
        #    Flat output row o = b*Hout + i maps to input rows 2o-1, 2o, 2o+1 (H even).
        top = xbuf_ref[pl.ds(7, Bo, stride=2), :]      # row 2o-1 (invalid when i == 0)
        center = xbuf_ref[pl.ds(8, Bo, stride=2), :]   # row 2o
        bottom = xbuf_ref[pl.ds(9, Bo, stride=2), :]   # row 2o+1 (always in-range, H even)

        # Zero the "top" tap on the first row of every image (it would otherwise read the
        # previous image's last row, or the uninitialized halo row for o == 0). A select
        # (not a multiply) so uninitialized halo bits can never propagate.
        oid = lax.broadcasted_iota(jnp.int32, top.shape, 0)
        if Hout & (Hout - 1) == 0:                     # power-of-two fast path (common)
            row_in_img = oid & (Hout - 1)
        else:
            row_in_img = oid % Hout
        top = jnp.where(row_in_img == 0, jnp.zeros_like(top), top)

        hsum = center + bottom + top                   # (Bo, W)

        # 3) W-direction pool + stride as ONE MXU matmul against the banded 0/1 matrix.
        #    Out-of-range W taps are absent from the band == zero padding; always /9.
        y = jnp.dot(hsum, mw_ref[...], preferred_element_type=jnp.float32)
        o_ref[...] = (y * (1.0 / 9.0)).astype(o_ref.dtype)

    return kernel


def _vmem_capacity_bytes():
    try:
        info = pltpu.get_tpu_info()
        cap = getattr(info, "vmem_capacity_bytes", None)
        if cap:
            return int(cap)
    except Exception:
        pass
    return 64 * 1024 * 1024  # conservative (v7x-sized) fallback


def _pick_tb(B, H, Hout, W, itemsize, tile_budget_bytes):
    """Images per grid step: divides B; keeps tb*H and tb*Hout sublane-aligned (multiple
    of 8) unless the block spans the whole array; fits the VMEM tile budget; prefers a
    grid of length >= 2 so v7x's two TensorCores both get work."""
    divisors = [d for d in range(1, B + 1) if B % d == 0]
    valid = [d for d in divisors
             if d == B or ((d * H) % 8 == 0 and (d * Hout) % 8 == 0)]
    slab = max(1, H * W * itemsize)
    fits = [d for d in valid if d * slab <= tile_budget_bytes]
    if not fits:
        # TODO(synk): also tile H (with a 1-row halo) for inputs too large for any legal tb.
        return min(valid)
    sub_full = [d for d in fits if d < B]
    return max(sub_full) if sub_full else max(fits)


def avg_pool2d_k3s2p1(x_nchw):
    """AvgPool2d(kernel=3, stride=2, padding=1, count_include_pad=True) on NCHW input."""
    N, C, H0, W = x_nchw.shape
    # Odd H: one appended zero row reproduces the bottom zero-padding exactly (the divisor
    # is 9 regardless) and makes H even so one flat stride-2 pattern covers every image.
    if H0 % 2 == 1:
        x_nchw = jnp.pad(x_nchw, ((0, 0), (0, 0), (0, 1), (0, 0)))
    H = H0 + (H0 % 2)
    Hout = H // 2                      # == (H0 - 1) // 2 + 1
    Wout = (W - 1) // 2 + 1
    B = N * C
    dtype = x_nchw.dtype
    itemsize = dtype.itemsize

    # Flat layout: W on lanes, all (image, row) pairs stacked on sublanes. Free reshape.
    x2 = x_nchw.reshape(B * H, W)

    # Banded 0/1 pooling matrix for W: column jo sums taps {2jo-1, 2jo, 2jo+1}; taps
    # outside [0, W) are simply absent from the band (== zero padding).
    w_idx = jnp.arange(W, dtype=jnp.int32)[:, None]
    centers = 2 * jnp.arange(Wout, dtype=jnp.int32)[None, :]
    mw = (jnp.abs(w_idx - centers) <= 1).astype(dtype)

    # Tile sizing from the actual chip VMEM. Live VMEM ~= 2x input tile (double buffer)
    # + haloed scratch (~1x) + 2x output tile + mw  =>  budget / 5 per input tile.
    vmem_budget = max(24 << 20, int(_vmem_capacity_bytes() * 0.45))
    tb = _pick_tb(B, H, Hout, W, itemsize, tile_budget_bytes=vmem_budget // 5)
    grid = (B // tb,)
    TH, Bo = tb * H, tb * Hout

    cost = pl.CostEstimate(
        flops=2 * B * Hout * W * Wout + 3 * B * Hout * W,
        transcendentals=0,
        bytes_accessed=(B * H * W + W * Wout + B * Hout * Wout) * itemsize,
    )

    out2 = pl.pallas_call(
        _make_kernel(Hout),
        out_shape=jax.ShapeDtypeStruct((B * Hout, Wout), dtype),
        grid_spec=pltpu.PrefetchScalarGridSpec(
            num_scalar_prefetch=0,
            grid=grid,
            in_specs=[
                pl.BlockSpec((TH, W), lambda i: (i, 0)),
                pl.BlockSpec((W, Wout), lambda i: (0, 0)),
            ],
            out_specs=pl.BlockSpec((Bo, Wout), lambda i: (i, 0)),
            scratch_shapes=[pltpu.VMEM((8 + TH, W), dtype)],
        ),
        compiler_params=pltpu.CompilerParams(
            # "parallel" lets v7x's 2 TensorCores split the batch-tile axis; there is no
            # cross-step scratch state, so the split is safe. No-op on v5e/v6e.
            dimension_semantics=("parallel",),
            vmem_limit_bytes=int(vmem_budget),
        ),
        cost_estimate=cost,
    )(x2, mw)

    return out2.reshape(N, C, Hout, Wout)


def input_projection_a(x_nchw, sampling_times):
    """Pallas equivalent of InputProjectionA.forward: returns the full pyramid list."""
    # TODO(synk): fuse level k+1 into level k's kernel epilogue (multi-output pallas_call)
    # so intermediate pyramid levels never round-trip HBM.
    out_list = [x_nchw]
    for _ in range(sampling_times):
        out_list.append(avg_pool2d_k3s2p1(out_list[-1]))
    return out_list


# --- pure-JAX reference (same math, no Pallas) for a correctness check ---
def _ref_avg_pool(x_nchw):
    N, C, H, W = x_nchw.shape
    Hout = (H - 1) // 2 + 1
    Wout = (W - 1) // 2 + 1
    xpad = jnp.pad(x_nchw, ((0, 0), (0, 0), (1, 1), (1, 1)))
    acc = jnp.zeros((N, C, Hout, Wout), jnp.float32)
    for di in range(3):
        for dj in range(3):
            acc = acc + xpad[:, :, di:di + 2 * Hout - 1:2,
                             dj:dj + 2 * Wout - 1:2].astype(jnp.float32)
    return (acc / 9.0).astype(x_nchw.dtype)


if __name__ == "__main__":
    key = jax.random.PRNGKey(0)
    # Small image-like NCHW input (batch=2, channels=4, spatial=16x16).
    x = jax.random.normal(key, (2, 4, 16, 16), dtype=jnp.float32)

    sampling_times = 2  # default constructor: k_list=[3,3], s_list=[2,2], padding=1
    outs = input_projection_a(x, sampling_times)
    outs = [jax.block_until_ready(o) for o in outs]

    # Expected pyramid shapes: (2,4,16,16) -> (2,4,8,8) -> (2,4,4,4)
    assert outs[0].shape == (2, 4, 16, 16)
    assert outs[1].shape == (2, 4, 8, 8)
    assert outs[2].shape == (2, 4, 4, 4)

    # Numerical check of the Pallas pooling levels against the pure-JAX reference.
    ref = x
    for level in range(1, sampling_times + 1):
        ref = _ref_avg_pool(ref)
        assert jnp.allclose(outs[level], ref, atol=1e-5, rtol=1e-5), f"mismatch at level {level}"

    print("KERNEL_OK")
</pallas_src>

<mosaic_0001>
module attributes {stable_mosaic.version = 11 : i64} {
  func.func @kernel(%arg0: i32, %arg1: memref<64x16xf32, #tpu.memory_space<vmem>>, %arg2: memref<16x8xf32, #tpu.memory_space<vmem>>, %arg3: memref<32x8xf32, #tpu.memory_space<vmem>>, %arg4: memref<72x16xf32, #tpu.memory_space<vmem>>) attributes {dimension_semantics = [#tpu.dimension_semantics<parallel>], iteration_bounds = array<i64: 2>, scalar_prefetch = 0 : i64, scratch_operands = 1 : i64, tpu.core_type = #tpu.core_type<tc>, window_params = [{transform_indices = @transform_0, window_bounds = array<i64: 64, 16>}, {pipeline_mode = #tpu.pipeline_mode<synchronous>, transform_indices = @transform_1, window_bounds = array<i64: 16, 8>}, {transform_indices = @transform_2, window_bounds = array<i64: 32, 8>}]} {
    %c0 = arith.constant 0 : index
    %c0_0 = arith.constant 0 : index
    %0 = vector.load %arg1[%c0, %c0_0] : memref<64x16xf32, #tpu.memory_space<vmem>>, vector<64x16xf32>
    %c8 = arith.constant 8 : index
    %c0_1 = arith.constant 0 : index
    %1 = vector.load %arg4[%c8, %c0_1] : memref<72x16xf32, #tpu.memory_space<vmem>>, vector<64x16xf32>
    tpu.vector_store %arg4[%c8, %c0_1], %0 {strides = array<i32>} : memref<72x16xf32, #tpu.memory_space<vmem>>, vector<64x16xf32>,
    %c7 = arith.constant 7 : index
    %c0_2 = arith.constant 0 : index
    %2 = tpu.strided_load %arg4[%c7, %c0_2] {strides = array<i32: 2, 1>} : memref<72x16xf32, #tpu.memory_space<vmem>>, vector<32x16xf32>
    %c8_3 = arith.constant 8 : index
    %c0_4 = arith.constant 0 : index
    %3 = tpu.strided_load %arg4[%c8_3, %c0_4] {strides = array<i32: 2, 1>} : memref<72x16xf32, #tpu.memory_space<vmem>>, vector<32x16xf32>
    %c9 = arith.constant 9 : index
    %c0_5 = arith.constant 0 : index
    %4 = tpu.strided_load %arg4[%c9, %c0_5] {strides = array<i32: 2, 1>} : memref<72x16xf32, #tpu.memory_space<vmem>>, vector<32x16xf32>
    %5 = tpu.iota {dimensions = array<i32: 0>} : vector<32x16xi32>
    %c7_i32 = arith.constant 7 : i32
    %6 = vector.broadcast %c7_i32 : i32 to vector<32x16xi32>
    %7 = arith.andi %5, %6 : vector<32x16xi32>
    %c0_i32 = arith.constant 0 : i32
    %8 = vector.broadcast %c0_i32 : i32 to vector<32x16xi32>
    %9 = arith.cmpi eq, %7, %8 : vector<32x16xi32>
    %cst = arith.constant 0.000000e+00 : f32
    %10 = vector.broadcast %cst : f32 to vector<32x16xf32>
    %11 = arith.select %9, %10, %2 : vector<32x16xi1>, vector<32x16xf32>
    %12 = arith.addf %3, %4 : vector<32x16xf32>
    %13 = arith.addf %12, %11 : vector<32x16xf32>
    %c0_6 = arith.constant 0 : index
    %c0_7 = arith.constant 0 : index
    %14 = vector.load %arg2[%c0_6, %c0_7] : memref<16x8xf32, #tpu.memory_space<vmem>>, vector<16x8xf32>
    %cst_8 = arith.constant dense<0.000000e+00> : vector<32x8xf32>
    %15 = tpu.matmul %13, %14, %cst_8 {dimension_numbers = #tpu.dot_dimension_numbers<[1], [0], [0], [1], [0, 0, 1, 1], [], []>} : vector<32x16xf32>, vector<16x8xf32>, vector<32x8xf32> -> vector<32x8xf32>
    %cst_9 = arith.constant 0.111111112 : f32
    %16 = vector.broadcast %cst_9 : f32 to vector<32x8xf32>
    %17 = arith.mulf %15, %16 : vector<32x8xf32>
    %c0_10 = arith.constant 0 : index
    %c0_11 = arith.constant 0 : index
    %18 = vector.load %arg3[%c0_10, %c0_11] : memref<32x8xf32, #tpu.memory_space<vmem>>, vector<32x8xf32>
    tpu.vector_store %arg3[%c0_10, %c0_11], %17 {strides = array<i32>} : memref<32x8xf32, #tpu.memory_space<vmem>>, vector<32x8xf32>,
    return
  }
  func.func @transform_0(%arg0: i32) -> (i32, i32) {
    %c0_i32 = arith.constant 0 : i32
    %c0_i32_0 = arith.constant 0 : i32
    return %arg0, %c0_i32 : i32, i32
  }
  func.func @transform_1(%arg0: i32) -> (i32, i32) {
    %c0_i32 = arith.constant 0 : i32
    %c0_i32_0 = arith.constant 0 : i32
    %c0_i32_1 = arith.constant 0 : i32
    return %c0_i32, %c0_i32_0 : i32, i32
  }
  func.func @transform_2(%arg0: i32) -> (i32, i32) {
    %c0_i32 = arith.constant 0 : i32
    %c0_i32_0 = arith.constant 0 : i32
    return %arg0, %c0_i32 : i32, i32
  }
}

</mosaic_0001>

<llo_original>
// kernel: tpu_custom_call.1
$region0: #{tpu_custom_call.1}
  #allocation0 [shape = 'u32[]', space=smem, size = 0x4, offset = 0x4, fixed_abs, tag = 'smem constant byte address 0x4 - core index']
  #allocation1 [shape = 'u32[144,128]{1,0:T(1,128)}', space=vmem, size = 0x12000, scoped, tag = 'internal scratch']
  #allocation2 [shape = 'f32[72,16]{1,0:T(8,128)}', space=vmem, size = 0x9000, scoped, tag = 'scratch operand']
  %s0 = inlined_call_operand.vmem [shape: f32[128,16], index: 0, kind: input, shape index: {}]
  %s1 = inlined_call_operand.vmem [shape: f32[16,8], index: 1, kind: input, shape index: {}]
  %s2 = inlined_call_operand.vmem [shape: f32[64,8], index: 2, kind: output, shape index: {}]
  %s3 = sld [smem:[#allocation0]]
  $region41: #{tpu_custom_call.1} parent=0
    _
  %s5 = ssub.s32 1, %s3
  %s6 = scalar_select 0, %s5, %s3
  loop: start=0, step=1, limit=4
  $region2: #{tpu_custom_call.1} parent=0 // loop_pre_header
    _
  $region3: #{tpu_custom_call.1} parent=0 // loop_header
    %s8 = sphi 0, %s12
    %p9 = scmp.ge.s32.totalorder %s8, 4
    %s18 = sphi 0, %s20
    %s21 = sphi 0, %s18
    %s22 = sphi 0, %s21
    %s38 = sphi 0, %s22
    %s42 = sphi 0, %s42
    %s44 = sphi 0, %s42
    %s45 = sphi 0, %s44
    %s59 = sphi 0, %s45
    %s65 = sphi 0, %s67
    %s68 = sphi 0, %s65
    %s69 = sphi 0, %s68
    %s85 = sphi 0, %s69
  $region4: #{tpu_custom_call.1} parent=0 // loop_header_branch
    %11 = sbr.rel (%p9) target = $region8
  $region5: #{tpu_custom_call.1} parent=0 // loop_body
    %s13 = ssub.s32 %s8, 1
    %s14 = ssub.s32 %s8, 2
    %s15 = sadd.s32 %s8, 1
    %s16 = ssub.s32 %s8, %s15
    %p17 = scmp.eq.s32.totalorder %s16, 0
    %s19 = sadd.s32 %s18, 1
    %s20 = scalar_select %p17, %s18, %s19
    %p23 = pneg %p17
    %p24 = scmp.eq.s32.totalorder %s8, 1
    %p25 = por %p23, %p24
    %p26 = scmp.ne.s32.totalorder %s18, %s21
    %p27 = scmp.eq.s32.totalorder %s8, 0
    %p28 = por %p26, %p27
    %p29 = scmp.ne.s32.totalorder %s18, %s21
    %p30 = scmp.eq.s32.totalorder %s13, 1
    %p31 = por %p29, %p30
    %p32 = scmp.ne.s32.totalorder %s21, %s22
    %p33 = scmp.eq.s32.totalorder %s13, 0
    %p34 = por %p32, %p33
    %p35 = scmp.ne.s32.totalorder %s21, %s22
    %p36 = scmp.eq.s32.totalorder %s14, 1
    %p37 = por %p35, %p36
    %p39 = scmp.ne.s32.totalorder %s22, %s38
    %p40 = scmp.eq.s32.totalorder %s14, 0
    %p41 = por %p39, %p40
    %s43 = sadd.s32 %s42, 1
    %p46 = scmp.eq.s32.totalorder %s8, 1
    %p47 = scmp.ne.s32.totalorder %s42, %s44
    %p48 = scmp.eq.s32.totalorder %s8, 0
    %p49 = por %p47, %p48
    %p50 = scmp.ne.s32.totalorder %s42, %s44
    %p51 = scmp.eq.s32.totalorder %s13, 1
    %p52 = por %p50, %p51
    %p53 = scmp.ne.s32.totalorder %s44, %s45
    %p54 = scmp.eq.s32.totalorder %s13, 0
    %p55 = por %p53, %p54
    %p56 = scmp.ne.s32.totalorder %s44, %s45
    %p57 = scmp.eq.s32.totalorder %s14, 1
    %p58 = por %p56, %p57
    %p60 = scmp.ne.s32.totalorder %s45, %s59
    %p61 = scmp.eq.s32.totalorder %s14, 0
    %p62 = por %p60, %p61
    %s63 = ssub.s32 %s8, %s15
    %p64 = scmp.eq.s32.totalorder %s63, 0
    %s66 = sadd.s32 %s65, 1
    %s67 = scalar_select %p64, %s65, %s66
    %p70 = pneg %p64
    %p71 = scmp.eq.s32.totalorder %s8, 1
    %p72 = por %p70, %p71
    %p73 = scmp.ne.s32.totalorder %s65, %s68
    %p74 = scmp.eq.s32.totalorder %s8, 0
    %p75 = por %p73, %p74
    %p76 = scmp.ne.s32.totalorder %s65, %s68
    %p77 = scmp.eq.s32.totalorder %s13, 1
    %p78 = por %p76, %p77
    %p79 = scmp.ne.s32.totalorder %s68, %s69
    %p80 = scmp.eq.s32.totalorder %s13, 0
    %p81 = por %p79, %p80
    %p82 = scmp.ne.s32.totalorder %s68, %s69
    %p83 = scmp.eq.s32.totalorder %s14, 1
    %p84 = por %p82, %p83
    %p86 = scmp.ne.s32.totalorder %s69, %s85
    %p87 = scmp.eq.s32.totalorder %s14, 0
    %p88 = por %p86, %p87
    %p89 = scmp.le.s32.totalorder 1, %s8
    %p90 = scmp.lt.s32.totalorder %s8, 3
    %p91 = pnand %p89, %p90
    %p92 = pneg %p91
    // Predicated region
    $region9: #{tpu_custom_call.1} parent=5 // pred_check
      _
    $region10: #{tpu_custom_call.1} parent=5 // pred_check_branch
      %94 = sbr.rel (%p91) target = $region12
    $region11: #{tpu_custom_call.1} parent=5 // pred_region
      %s95 = ssub.s32 %s8, 1
      // Predicated region
      $region13: #{tpu_custom_call.1} parent=11 // pred_check
        %p96 = pneg %p55
      $region14: #{tpu_custom_call.1} parent=11 // pred_check_branch
        %98 = sbr.rel (%p96) target = $region16
      $region15: #{tpu_custom_call.1} parent=11 // pred_region
        _
      $region16: #{tpu_custom_call.1} parent=11 // pred_fallthru
        _
    $region12: #{tpu_custom_call.1} parent=5 // pred_fallthru
      _
    %p99 = scmp.lt.s32.totalorder %s8, 2
    // Predicated region
    $region17: #{tpu_custom_call.1} parent=5 // pred_check
      %p100 = pneg %p99
    $region18: #{tpu_custom_call.1} parent=5 // pred_check_branch
      %102 = sbr.rel (%p100) target = $region20
    $region19: #{tpu_custom_call.1} parent=5 // pred_region
      // Predicated region
      $region21: #{tpu_custom_call.1} parent=19 // pred_check
        %p103 = pneg %p28
      $region22: #{tpu_custom_call.1} parent=19 // pred_check_branch
        %105 = sbr.rel (%p103) target = $region24
      $region23: #{tpu_custom_call.1} parent=19 // pred_region
        %s106 = smul.u32 8, %s8
        %p107 = scmp.lt.s32.totalorder %s106, 15
        %s108 = scalar_select %p107, %s106, 15
        %s109 = smul.addr %s108, 8
        %s110 = scalar_lea.vmem %s0, %s109
        %s111 = smul.u32 8, %s8
      $region24: #{tpu_custom_call.1} parent=19 // pred_fallthru
        _
    $region20: #{tpu_custom_call.1} parent=5 // pred_fallthru
      _
    %p112 = scmp.le.s32.totalorder 1, %s8
    %p113 = scmp.lt.s32.totalorder %s8, 3
    %p114 = pnand %p112, %p113
    %p115 = pneg %p114
    // Predicated region
    $region25: #{tpu_custom_call.1} parent=5 // pred_check
      _
    $region26: #{tpu_custom_call.1} parent=5 // pred_check_branch
      %117 = sbr.rel (%p114) target = $region28
    $region27: #{tpu_custom_call.1} parent=5 // pred_region
      %s118 = ssub.s32 %s8, 1
      %s119 = smul.u32 8, %s13
      %p120 = scmp.lt.s32.totalorder %s119, 15
      %s121 = scalar_select %p120, %s119, 15
      %s122 = smul.addr %s121, 8
      %s123 = scalar_lea.vmem %s0, %s122
      %p124 = pneg %p34
      %p125 = pneg %p31
      %p126 = pneg %p55
      %p127 = pneg %p52
      %p128 = pneg %p81
      %p129 = pneg %p78
      %s130 = smul.u32 4, %s13
      %p131 = scmp.lt.s32.totalorder %s130, 7
      %s132 = scalar_select %p131, %s130, 7
      %s133 = smul.addr %s132, 8
      %s134 = scalar_lea.vmem %s2, %s133
      %s135 = smul.u32 8, %s13
      %p136 = scmp.lt.s32.totalorder %s135, 15
      %s137 = scalar_select %p136, %s135, 15
      %s138 = smul.addr %s137, 8
      %s139 = scalar_lea.vmem %s0, %s138
      %s140 = smul.u32 8, %s13
      %s141 = smul.u32 4, %s13
      %p142 = scmp.lt.s32.totalorder %s141, 7
      %s143 = scalar_select %p142, %s141, 7
      %s144 = smul.addr %s143, 8
      %s145 = scalar_lea.vmem %s2, %s144
      %s146 = smul.u32 4, %s13
      %v147 = vld [vmem:[%s139] sm:$0xff]
      %v148 = vld [vmem:[%s139 + $0x8] sm:$0xff]
      %v149 = vld [vmem:[%s139 + $0x10] sm:$0xff]
      %v150 = vld [vmem:[%s139 + $0x18] sm:$0xff]
      %v151 = vld [vmem:[%s139 + $0x20] sm:$0xff]
      %v152 = vld [vmem:[%s139 + $0x28] sm:$0xff]
      %v153 = vld [vmem:[%s139 + $0x30] sm:$0xff]
      %v154 = vld [vmem:[%s139 + $0x38] sm:$0xff]
      %vm155 = vcmask 130048
      %156 = vst.msk [vmem:[#allocation2 + $0x8] sm:$0xff] %vm155, %v147
      %157 = vst.msk [vmem:[#allocation2 + $0x10] sm:$0xff] %vm155, %v148
      %158 = vst.msk [vmem:[#allocation2 + $0x18] sm:$0xff] %vm155, %v149
      %159 = vst.msk [vmem:[#allocation2 + $0x20] sm:$0xff] %vm155, %v150
      %160 = vst.msk [vmem:[#allocation2 + $0x28] sm:$0xff] %vm155, %v151
      %161 = vst.msk [vmem:[#allocation2 + $0x30] sm:$0xff] %vm155, %v152
      %162 = vst.msk [vmem:[#allocation2 + $0x38] sm:$0xff] %vm155, %v153
      %163 = vst.msk [vmem:[#allocation2 + $0x40] sm:$0xff] %vm155, %v154
      %s164 = scalar_lea.vmem [#allocation2], 7
      %v165 = vld [vmem:[%s164] ss:$2 sm:$0xff]
      %s166 = scalar_lea.vmem [#allocation2], 23
      %v167 = vld [vmem:[%s166] ss:$2 sm:$0xff]
      %s168 = scalar_lea.vmem [#allocation2], 39
      %v169 = vld [vmem:[%s168] ss:$2 sm:$0xff]
      %s170 = scalar_lea.vmem [#allocation2], 55
      %v171 = vld [vmem:[%s170] ss:$2 sm:$0xff]
      %s172 = scalar_lea.vmem [#allocation2], 8
      %v173 = vld [vmem:[%s172] ss:$2 sm:$0xff]
      %s174 = scalar_lea.vmem [#allocation2], 24
      %v175 = vld [vmem:[%s174] ss:$2 sm:$0xff]
      %s176 = scalar_lea.vmem [#allocation2], 40
      %v177 = vld [vmem:[%s176] ss:$2 sm:$0xff]
      %s178 = scalar_lea.vmem [#allocation2], 56
      %v179 = vld [vmem:[%s178] ss:$2 sm:$0xff]
      %s180 = scalar_lea.vmem [#allocation2], 9
      %v181 = vld [vmem:[%s180] ss:$2 sm:$0xff]
      %s182 = scalar_lea.vmem [#allocation2], 25
      %v183 = vld [vmem:[%s182] ss:$2 sm:$0xff]
      %s184 = scalar_lea.vmem [#allocation2], 41
      %v185 = vld [vmem:[%s184] ss:$2 sm:$0xff]
      %s186 = scalar_lea.vmem [#allocation2], 57
      %v187 = vld [vmem:[%s186] ss:$2 sm:$0xff]
      %v188 = vlaneseq
      %v189 = vshrl.u32 %v188, 7
      %v190 = vadd.s32 %v189, 8
      %v191 = vadd.s32 %v189, 16
      %v192 = vadd.s32 %v189, 24
      %v193 = vand.u32 %v189, 7
      %v194 = vand.u32 %v190, 7
      %v195 = vand.u32 %v191, 7
      %v196 = vand.u32 %v192, 7
      %vm197 = vcmp.eq.s32.totalorder %v193, 0
      %vm198 = vcmp.eq.s32.totalorder %v194, 0
      %vm199 = vcmp.eq.s32.totalorder %v195, 0
      %vm200 = vcmp.eq.s32.totalorder %v196, 0
      %v201 = vsel %vm197, 0.0, %v165
      %v202 = vsel %vm198, 0.0, %v167
      %v203 = vsel %vm199, 0.0, %v169
      %v204 = vsel %vm200, 0.0, %v171
      %v205 = vadd.f32 %v173, %v181
      %v206 = vadd.f32 %v175, %v183
      %v207 = vadd.f32 %v177, %v185
      %v208 = vadd.f32 %v179, %v187
      %v209 = vadd.f32 %v205, %v201
      %v210 = vadd.f32 %v206, %v202
      %v211 = vadd.f32 %v207, %v203
      %v212 = vadd.f32 %v208, %v204
      %v213 = vld [vmem:[%s1] sm:$0xff]
      %v214 = vld [vmem:[%s1 + $0x8] sm:$0xff]
      %v216 = vsel %vm155, %v209, 0
      %v219 = vsel %vm155, %v210, 0
      %v222 = vsel %vm155, %v211, 0
      %v225 = vsel %vm155, %v212, 0
      %227 = vmatprep.subr.mxu0 0.0
      %228 = vmatpush1.msra.mxu0 %v213
      %229 = vmatprep.subr.mxu0 0.0
      %230 = vmatpush1.msra.mxu0 %v214
      %231 = vmatprep.subr.mxu0 0.0
      %232 = vmatpush1.msra.mxu0 0.0
      %233 = vmatprep.subr.mxu0 0.0
      %234 = vmatpush1.msra.mxu0 0.0
      %235 = vmatprep.subr.mxu0 0.0
      %236 = vmatpush1.msra.mxu0 0.0
      %237 = vmatprep.subr.mxu0 0.0
      %238 = vmatpush1.msra.mxu0 0.0
      %239 = vmatprep.subr.mxu0 0.0
      %240 = vmatpush1.msra.mxu0 0.0
      %241 = vmatprep.subr.mxu0 0.0
      %242 = vmatpush1.msra.mxu0 0.0
      %243 = vmatprep.subr.mxu0 0.0
      %244 = vmatpush1.msra.mxu0 0.0
      %245 = vmatprep.subr.mxu0 0.0
      %246 = vmatpush1.msra.mxu0 0.0
      %247 = vmatprep.subr.mxu0 0.0
      %248 = vmatpush1.msra.mxu0 0.0
      %249 = vmatprep.subr.mxu0 0.0
      %250 = vmatpush1.msra.mxu0 0.0
      %251 = vmatprep.subr.mxu0 0.0
      %252 = vmatpush1.msra.mxu0 0.0
      %253 = vmatprep.subr.mxu0 0.0
      %254 = vmatpush1.msra.mxu0 0.0
      %255 = vmatprep.subr.mxu0 0.0
      %256 = vmatpush1.msra.mxu0 0.0
      %257 = vmatprep.subr.mxu0 0.0
      %258 = vmatpush1.msra.mxu0 0.0
      %259 = vmatprep.subr.mxu0 0.0
      %260 = vmatpush1.msra.mxu0 0.0
      %261 = vmatprep.subr.mxu0 0.0
      %262 = vmatpush1.msra.mxu0 0.0
      %263 = vmatprep.subr.mxu0 0.0
      %264 = vmatpush1.msra.mxu0 0.0
      %265 = vmatprep.subr.mxu0 0.0
      %266 = vmatpush1.msra.mxu0 0.0
      %267 = vmatprep.subr.mxu0 0.0
      %268 = vmatpush1.msra.mxu0 0.0
      %269 = vmatprep.subr.mxu0 0.0
      %270 = vmatpush1.msra.mxu0 0.0
      %271 = vmatprep.subr.mxu0 0.0
      %272 = vmatpush1.msra.mxu0 0.0
      %273 = vmatprep.subr.mxu0 0.0
      %274 = vmatpush1.msra.mxu0 0.0
      %275 = vmatprep.subr.mxu0 0.0
      %276 = vmatpush1.msra.mxu0 0.0
      %277 = vmatprep.subr.mxu0 0.0
      %278 = vmatpush1.msra.mxu0 0.0
      %279 = vmatprep.subr.mxu0 0.0
      %280 = vmatpush1.msra.mxu0 0.0
      %281 = vmatprep.subr.mxu0 0.0
      %282 = vmatpush1.msra.mxu0 0.0
      %283 = vmatprep.subr.mxu0 0.0
      %284 = vmatpush1.msra.mxu0 0.0
      %285 = vmatprep.subr.mxu0 0.0
      %286 = vmatpush1.msra.mxu0 0.0
      %287 = vmatprep.subr.mxu0 0.0
      %288 = vmatpush1.msra.mxu0 0.0
      %289 = vmatprep.subr.mxu0 0.0
      %290 = vmatpush1.msra.mxu0 0.0
      %291 = vmatprep.mubr.f32.mxu0 0.0
      %292 = vmatmul.mubr.f32.gmra.mrb[0].mxu0 %v216
      %v293 = vpop.f32.mrb[0].mxu0
      %v294 = vadd.f32 0.0, %v293
      %v295 = vpop.f32.mrb[0].mxu0
      %296 = vmatprep.mubr.f32.mxu0 0.0
      %297 = vmatmul.mubr.f32.gmra.mrb[0].mxu0 %v219
      %v298 = vpop.f32.mrb[0].mxu0
      %v299 = vadd.f32 0.0, %v298
      %v300 = vpop.f32.mrb[0].mxu0
      %301 = vmatprep.mubr.f32.mxu0 0.0
      %302 = vmatmul.mubr.f32.gmra.mrb[0].mxu0 %v222
      %v303 = vpop.f32.mrb[0].mxu0
      %v304 = vadd.f32 0.0, %v303
      %v305 = vpop.f32.mrb[0].mxu0
      %306 = vmatprep.mubr.f32.mxu0 0.0
      %307 = vmatmul.mubr.f32.gmra.mrb[0].mxu0 %v225
      %v308 = vpop.f32.mrb[0].mxu0
      %v309 = vadd.f32 0.0, %v308
      %v310 = vpop.f32.mrb[0].mxu0
      %311 = vdwg.mxu0
      %v312 = vmul.f32 %v294, 0.11111111
      %v313 = vmul.f32 %v299, 0.11111111
      %v314 = vmul.f32 %v304, 0.11111111
      %v315 = vmul.f32 %v309, 0.11111111
      %vm316 = vcmask 64512
      %317 = vst.msk [vmem:[%s145] sm:$0xff] %vm316, %v312
      %318 = vst.msk [vmem:[%s145 + $0x8] sm:$0xff] %vm316, %v313
      %319 = vst.msk [vmem:[%s145 + $0x10] sm:$0xff] %vm316, %v314
      %320 = vst.msk [vmem:[%s145 + $0x18] sm:$0xff] %vm316, %v315
      %s321 = smul.u32 4, %s13
      %p322 = scmp.lt.s32.totalorder %s321, 7
      %s323 = scalar_select %p322, %s321, 7
      %s324 = smul.addr %s323, 8
      %s325 = scalar_lea.vmem %s2, %s324
      // Predicated region
      $region29: #{tpu_custom_call.1} parent=27 // pred_check
        %p326 = pneg %p78
      $region30: #{tpu_custom_call.1} parent=27 // pred_check_branch
        %328 = sbr.rel (%p326) target = $region32
      $region31: #{tpu_custom_call.1} parent=27 // pred_region
        %s329 = smul.u32 4, %s13
      $region32: #{tpu_custom_call.1} parent=27 // pred_fallthru
        _
    $region28: #{tpu_custom_call.1} parent=5 // pred_fallthru
      _
    %p330 = scmp.le.s32.totalorder 2, %s8
    // Predicated region
    $region33: #{tpu_custom_call.1} parent=5 // pred_check
      %p331 = pneg %p330
    $region34: #{tpu_custom_call.1} parent=5 // pred_check_branch
      %333 = sbr.rel (%p331) target = $region36
    $region35: #{tpu_custom_call.1} parent=5 // pred_region
      %s334 = ssub.s32 %s8, 2
      // Predicated region
      $region37: #{tpu_custom_call.1} parent=35 // pred_check
        %p335 = pneg %p84
      $region38: #{tpu_custom_call.1} parent=35 // pred_check_branch
        %337 = sbr.rel (%p335) target = $region40
      $region39: #{tpu_custom_call.1} parent=35 // pred_region
        %s338 = smul.u32 4, %s14
        %p339 = scmp.lt.s32.totalorder %s338, 7
        %s340 = scalar_select %p339, %s338, 7
        %s341 = smul.addr %s340, 8
        %s342 = scalar_lea.vmem %s2, %s341
      $region40: #{tpu_custom_call.1} parent=35 // pred_fallthru
        _
    $region36: #{tpu_custom_call.1} parent=5 // pred_fallthru
      _
  $region6: #{tpu_custom_call.1} parent=0 // loop_footer
    %s12 = sadd.s32 1, %s8
  $region7: #{tpu_custom_call.1} parent=0 // loop_footer_branch
    %7 = sbr.rel target = $region3
  $region8: #{tpu_custom_call.1} parent=0 // loop_exit
    _

</llo_original>
